<compile_context>
chip_gen: v5e
topology: v5e:2x2
jax: 0.10.0
libtpu: 0.0.40
codegen_flags: <defaults>
</compile_context>

<pallas_src>
import functools

import jax
import jax.numpy as jnp
from jax import lax
from jax.experimental import pallas as pl
from jax.experimental.pallas import tpu as pltpu

_LANE = 128
_SUBLANE = 8
_MXU_DTYPE = jnp.bfloat16     # MXU operand dtype; accumulation stays f32
_NEG = -1e30                  # bias for padded logit columns (softmax-neutral)
_EPS = 1e-5


def _round_up(n, m):
    return ((n + m - 1) // m) * m


def _pad_axis(x, axis, target, value=0.0):
    pad = target - x.shape[axis]
    if pad <= 0:
        return x
    widths = [(0, 0)] * x.ndim
    widths[axis] = (0, pad)
    return jnp.pad(x, widths, constant_values=value)


def _ffn01_kernel(posts_ref, replies_ref,
                  pmean_ref, pinv_ref, rmean_ref, rinv_ref,
                  wp_ref, bp_ref, wr_ref, br_ref,
                  whp_ref, whr_ref, bh_ref,
                  wo_ref, bo_ref,
                  out_ref):
    # BatchNorm apply — statistics precomputed over the FULL batch outside the
    # kernel, so tiling the batch axis does not change results. f32 elementwise.
    p_in = (posts_ref[...].astype(jnp.float32) - pmean_ref[...]) * pinv_ref[...]
    r_in = (replies_ref[...].astype(jnp.float32) - rmean_ref[...]) * rinv_ref[...]

    # AlphaDropout == identity (inference).
    # Cast MXU operands to bf16, accumulate in f32; biases/ReLU stay f32.
    p = (jnp.dot(p_in.astype(_MXU_DTYPE), wp_ref[...],
                 preferred_element_type=jnp.float32) + bp_ref[...])
    r = (jnp.dot(r_in.astype(_MXU_DTYPE), wr_ref[...],
                 preferred_element_type=jnp.float32) + br_ref[...])
    p = jnp.maximum(p, 0.0)   # in_p_activation
    r = jnp.maximum(r, 0.0)   # in_r_activation

    # cat([p, r], dim=1) @ W_hl1  ==  p @ W_hl1[:P] + r @ W_hl1[P:]
    h = (jnp.dot(p.astype(_MXU_DTYPE), whp_ref[...],
                 preferred_element_type=jnp.float32)
         + jnp.dot(r.astype(_MXU_DTYPE), whr_ref[...],
                   preferred_element_type=jnp.float32)
         + bh_ref[...])
    h = jnp.maximum(h, 0.0)   # hl1_activation

    logits = (jnp.dot(h.astype(_MXU_DTYPE), wo_ref[...],
                      preferred_element_type=jnp.float32) + bo_ref[...])

    # log_softmax over dim=1. Padded columns have bias -1e30 -> exp underflows
    # to exactly 0, so they do not perturb max / sum over the real columns.
    m = jnp.max(logits, axis=1, keepdims=True)
    z = logits - m
    lse = jnp.log(jnp.sum(jnp.exp(z), axis=1, keepdims=True))
    out_ref[...] = (z - lse).astype(out_ref.dtype)


def prepare_params(params):
    """One-time weight padding + bf16 cast (hoisted out of the hot path)."""
    (wp, bp, wr, br, whp, whr, bh, wo, bo) = params
    PL, RL = wp.shape[1], wr.shape[1]
    H, O = wo.shape
    PLp, RLp, Hp, Op = (_round_up(d, _LANE) for d in (PL, RL, H, O))

    wp_p = _pad_axis(wp, 1, PLp).astype(_MXU_DTYPE)
    wr_p = _pad_axis(wr, 1, RLp).astype(_MXU_DTYPE)
    whp_p = _pad_axis(_pad_axis(whp, 0, PLp), 1, Hp).astype(_MXU_DTYPE)
    whr_p = _pad_axis(_pad_axis(whr, 0, RLp), 1, Hp).astype(_MXU_DTYPE)
    wo_p = _pad_axis(_pad_axis(wo, 0, Hp), 1, Op).astype(_MXU_DTYPE)
    bp_p = _pad_axis(bp, 1, PLp).astype(jnp.float32)
    br_p = _pad_axis(br, 1, RLp).astype(jnp.float32)
    bh_p = _pad_axis(bh, 1, Hp).astype(jnp.float32)
    bo_p = _pad_axis(bo, 1, Op, value=_NEG).astype(jnp.float32)

    prepped = (wp_p, bp_p, wr_p, br_p, whp_p, whr_p, bh_p, wo_p, bo_p)
    prepped = tuple(jax.device_put(a) for a in prepped)
    return prepped, O


@functools.partial(jax.jit, static_argnames=("out_dim", "batch_tile"))
def ffn01_forward(posts, replies, prepped, *, out_dim, batch_tile=1024):
    (wp_p, bp_p, wr_p, br_p, whp_p, whr_p, bh_p, wo_p, bo_p) = prepped
    B, P_IN = posts.shape
    _, R_IN = replies.shape
    Op = wo_p.shape[1]

    posts = posts.astype(jnp.float32)
    replies = replies.astype(jnp.float32)

    # ---- BatchNorm statistics prologue (plain XLA reduce, full batch) ----
    def stats(x):
        m = jnp.mean(x, axis=0, keepdims=True)
        v = jnp.mean(x * x, axis=0, keepdims=True) - m * m    # one-pass biased var
        return m, lax.rsqrt(jnp.maximum(v, 0.0) + _EPS)

    p_mean, p_inv = stats(posts)
    r_mean, r_inv = stats(replies)

    # ---- batch tiling (sublane-aligned; footprint stays well under 64 MiB) ----
    TB = _round_up(min(batch_tile, B), _SUBLANE)
    Bp = _round_up(B, TB)
    posts_p = _pad_axis(posts, 0, Bp)
    replies_p = _pad_axis(replies, 0, Bp)
    grid = (Bp // TB,)

    def tiled(d):                     # batch-tiled input
        return pl.BlockSpec((TB, d), lambda i: (i, 0))

    def resident(arr):                # VMEM-resident across grid steps
        return pl.BlockSpec(arr.shape, lambda i: (0, 0))

    args = (posts_p, replies_p,
            p_mean, p_inv, r_mean, r_inv,
            wp_p, bp_p, wr_p, br_p,
            whp_p, whr_p, bh_p,
            wo_p, bo_p)
    in_specs = [tiled(P_IN), tiled(R_IN)] + [resident(a) for a in args[2:]]

    out = pl.pallas_call(
        _ffn01_kernel,
        out_shape=jax.ShapeDtypeStruct((Bp, Op), jnp.float32),
        grid=grid,
        in_specs=in_specs,
        out_specs=pl.BlockSpec((TB, Op), lambda i: (i, 0)),
        compiler_params=pltpu.CompilerParams(
            dimension_semantics=("parallel",),       # batch blocks -> both TCs on v7x
            vmem_limit_bytes=64 * 1024 * 1024),
    )(*args)

    return out[:B, :out_dim]


# ------------------------- init + reference + test -------------------------

def _kaiming_normal(key, fan_in, fan_out, a=0.0):
    # torch.nn.init.kaiming_normal (mode='fan_in', leaky_relu gain), stored (in, out).
    gain = jnp.sqrt(2.0 / (1.0 + a * a))
    std = gain / jnp.sqrt(float(fan_in))
    return jax.random.normal(key, (fan_in, fan_out), jnp.float32) * std


def _bias(key, fan_in, fan_out):
    # torch Linear default bias init: U(-1/sqrt(fan_in), 1/sqrt(fan_in)); kept (1, out).
    bound = 1.0 / jnp.sqrt(float(fan_in))
    return jax.random.uniform(key, (1, fan_out), jnp.float32, -bound, bound)


def init_params(key, post_in, reply_in, post_l, reply_l, hidden_1, out_size):
    a = 0.4678478066834172
    ks = jax.random.split(key, 8)
    wp = _kaiming_normal(ks[0], post_in, post_l, a=a)
    bp = _bias(ks[1], post_in, post_l)
    wr = _kaiming_normal(ks[2], reply_in, reply_l, a=0.0)
    br = _bias(ks[3], reply_in, reply_l)
    wh = _kaiming_normal(ks[4], post_l + reply_l, hidden_1, a=a)
    bh = _bias(ks[5], post_l + reply_l, hidden_1)
    whp, whr = wh[:post_l], wh[post_l:]        # split for concat-free matmul
    wo = _kaiming_normal(ks[6], hidden_1, out_size, a=a)
    bo = _bias(ks[7], hidden_1, out_size)
    return (wp, bp, wr, br, whp, whr, bh, wo, bo)


def _reference(posts, replies, params, mxu_dtype=jnp.float32):
    (wp, bp, wr, br, whp, whr, bh, wo, bo) = params

    def bn(x):
        m = jnp.mean(x, axis=0, keepdims=True)
        v = jnp.mean(x * x, axis=0, keepdims=True) - m * m
        return (x - m) * lax.rsqrt(jnp.maximum(v, 0.0) + _EPS)

    def dot(a, w):
        return jnp.dot(a.astype(mxu_dtype), w.astype(mxu_dtype),
                       preferred_element_type=jnp.float32)

    p = jnp.maximum(dot(bn(posts), wp) + bp, 0.0)
    r = jnp.maximum(dot(bn(replies), wr) + br, 0.0)
    h = jnp.maximum(dot(p, whp) + dot(r, whr) + bh, 0.0)
    logits = dot(h, wo) + bo
    return jax.nn.log_softmax(logits, axis=1)


if __name__ == "__main__":
    # Small synthetic sizes consistent with the module's forward.
    B = 8
    POST_IN, REPLY_IN = 16, 16
    POST_L, REPLY_L = 32, 32
    HIDDEN_1, OUT = 32, 2

    key = jax.random.PRNGKey(0)
    k_posts, k_replies, k_params = jax.random.split(key, 3)
    posts = jax.random.normal(k_posts, (B, POST_IN), jnp.float32)
    replies = jax.random.normal(k_replies, (B, REPLY_IN), jnp.float32)
    params = init_params(k_params, POST_IN, REPLY_IN, POST_L, REPLY_L, HIDDEN_1, OUT)

    prepped, out_dim = prepare_params(params)
    out = ffn01_forward(posts, replies, prepped, out_dim=out_dim)
    out = jax.block_until_ready(out)
    assert out.shape == (B, OUT)

    # Tight check against a JAX reference using the same bf16-operand / f32-acc
    # matmul numerics as the kernel.
    ref_bf16 = _reference(posts, replies, params, mxu_dtype=_MXU_DTYPE)
    assert jnp.allclose(out, ref_bf16, atol=1e-3, rtol=1e-3), "mismatch vs bf16 reference"

    # Looser sanity check against the full-f32 module semantics.
    ref_f32 = _reference(posts, replies, params, mxu_dtype=jnp.float32)
    assert jnp.allclose(out, ref_f32, atol=1e-1, rtol=1e-1), "mismatch vs f32 reference"

    print("KERNEL_OK")
</pallas_src>

<mosaic_0001>
module attributes {stable_mosaic.version = 11 : i64} {
  func.func @_ffn01_kernel(%arg0: i32, %arg1: memref<8x16xf32, #tpu.memory_space<vmem>>, %arg2: memref<8x16xf32, #tpu.memory_space<vmem>>, %arg3: memref<1x16xf32, #tpu.memory_space<vmem>>, %arg4: memref<1x16xf32, #tpu.memory_space<vmem>>, %arg5: memref<1x16xf32, #tpu.memory_space<vmem>>, %arg6: memref<1x16xf32, #tpu.memory_space<vmem>>, %arg7: memref<16x128xbf16, #tpu.memory_space<vmem>>, %arg8: memref<1x128xf32, #tpu.memory_space<vmem>>, %arg9: memref<16x128xbf16, #tpu.memory_space<vmem>>, %arg10: memref<1x128xf32, #tpu.memory_space<vmem>>, %arg11: memref<128x128xbf16, #tpu.memory_space<vmem>>, %arg12: memref<128x128xbf16, #tpu.memory_space<vmem>>, %arg13: memref<1x128xf32, #tpu.memory_space<vmem>>, %arg14: memref<128x128xbf16, #tpu.memory_space<vmem>>, %arg15: memref<1x128xf32, #tpu.memory_space<vmem>>, %arg16: memref<8x128xf32, #tpu.memory_space<vmem>>) attributes {dimension_semantics = [#tpu.dimension_semantics<parallel>], iteration_bounds = array<i64: 1>, scalar_prefetch = 0 : i64, scratch_operands = 0 : i64, tpu.core_type = #tpu.core_type<tc>, window_params = [{transform_indices = @transform_0, window_bounds = array<i64: 8, 16>}, {transform_indices = @transform_1, window_bounds = array<i64: 8, 16>}, {pipeline_mode = #tpu.pipeline_mode<synchronous>, transform_indices = @transform_2, window_bounds = array<i64: 1, 16>}, {pipeline_mode = #tpu.pipeline_mode<synchronous>, transform_indices = @transform_3, window_bounds = array<i64: 1, 16>}, {pipeline_mode = #tpu.pipeline_mode<synchronous>, transform_indices = @transform_4, window_bounds = array<i64: 1, 16>}, {pipeline_mode = #tpu.pipeline_mode<synchronous>, transform_indices = @transform_5, window_bounds = array<i64: 1, 16>}, {pipeline_mode = #tpu.pipeline_mode<synchronous>, transform_indices = @transform_6, window_bounds = array<i64: 16, 128>}, {pipeline_mode = #tpu.pipeline_mode<synchronous>, transform_indices = @transform_7, window_bounds = array<i64: 1, 128>}, {pipeline_mode = #tpu.pipeline_mode<synchronous>, transform_indices = @transform_8, window_bounds = array<i64: 16, 128>}, {pipeline_mode = #tpu.pipeline_mode<synchronous>, transform_indices = @transform_9, window_bounds = array<i64: 1, 128>}, {pipeline_mode = #tpu.pipeline_mode<synchronous>, transform_indices = @transform_10, window_bounds = array<i64: 128, 128>}, {pipeline_mode = #tpu.pipeline_mode<synchronous>, transform_indices = @transform_11, window_bounds = array<i64: 128, 128>}, {pipeline_mode = #tpu.pipeline_mode<synchronous>, transform_indices = @transform_12, window_bounds = array<i64: 1, 128>}, {pipeline_mode = #tpu.pipeline_mode<synchronous>, transform_indices = @transform_13, window_bounds = array<i64: 128, 128>}, {pipeline_mode = #tpu.pipeline_mode<synchronous>, transform_indices = @transform_14, window_bounds = array<i64: 1, 128>}, {transform_indices = @transform_15, window_bounds = array<i64: 8, 128>}]} {
    %c0 = arith.constant 0 : index
    %c0_0 = arith.constant 0 : index
    %0 = vector.load %arg1[%c0, %c0_0] : memref<8x16xf32, #tpu.memory_space<vmem>>, vector<8x16xf32>
    %c0_1 = arith.constant 0 : index
    %c0_2 = arith.constant 0 : index
    %1 = vector.load %arg3[%c0_1, %c0_2] : memref<1x16xf32, #tpu.memory_space<vmem>>, vector<1x16xf32>
    %2 = vector.broadcast %1 : vector<1x16xf32> to vector<8x16xf32>
    %3 = arith.subf %0, %2 : vector<8x16xf32>
    %c0_3 = arith.constant 0 : index
    %c0_4 = arith.constant 0 : index
    %4 = vector.load %arg4[%c0_3, %c0_4] : memref<1x16xf32, #tpu.memory_space<vmem>>, vector<1x16xf32>
    %5 = vector.broadcast %4 : vector<1x16xf32> to vector<8x16xf32>
    %6 = arith.mulf %3, %5 : vector<8x16xf32>
    %c0_5 = arith.constant 0 : index
    %c0_6 = arith.constant 0 : index
    %7 = vector.load %arg2[%c0_5, %c0_6] : memref<8x16xf32, #tpu.memory_space<vmem>>, vector<8x16xf32>
    %c0_7 = arith.constant 0 : index
    %c0_8 = arith.constant 0 : index
    %8 = vector.load %arg5[%c0_7, %c0_8] : memref<1x16xf32, #tpu.memory_space<vmem>>, vector<1x16xf32>
    %9 = vector.broadcast %8 : vector<1x16xf32> to vector<8x16xf32>
    %10 = arith.subf %7, %9 : vector<8x16xf32>
    %c0_9 = arith.constant 0 : index
    %c0_10 = arith.constant 0 : index
    %11 = vector.load %arg6[%c0_9, %c0_10] : memref<1x16xf32, #tpu.memory_space<vmem>>, vector<1x16xf32>
    %12 = vector.broadcast %11 : vector<1x16xf32> to vector<8x16xf32>
    %13 = arith.mulf %10, %12 : vector<8x16xf32>
    %14 = arith.truncf %6 : vector<8x16xf32> to vector<8x16xbf16>
    %c0_11 = arith.constant 0 : index
    %c0_12 = arith.constant 0 : index
    %15 = vector.load %arg7[%c0_11, %c0_12] : memref<16x128xbf16, #tpu.memory_space<vmem>>, vector<16x128xbf16>
    %cst = arith.constant dense<0.000000e+00> : vector<8x128xf32>
    %16 = tpu.matmul %14, %15, %cst {dimension_numbers = #tpu.dot_dimension_numbers<[1], [0], [0], [1], [0, 0, 1, 1], [], []>} : vector<8x16xbf16>, vector<16x128xbf16>, vector<8x128xf32> -> vector<8x128xf32>
    %c0_13 = arith.constant 0 : index
    %c0_14 = arith.constant 0 : index
    %17 = vector.load %arg8[%c0_13, %c0_14] : memref<1x128xf32, #tpu.memory_space<vmem>>, vector<1x128xf32>
    %18 = vector.broadcast %17 : vector<1x128xf32> to vector<8x128xf32>
    %19 = arith.addf %16, %18 : vector<8x128xf32>
    %20 = arith.truncf %13 : vector<8x16xf32> to vector<8x16xbf16>
    %c0_15 = arith.constant 0 : index
    %c0_16 = arith.constant 0 : index
    %21 = vector.load %arg9[%c0_15, %c0_16] : memref<16x128xbf16, #tpu.memory_space<vmem>>, vector<16x128xbf16>
    %cst_17 = arith.constant dense<0.000000e+00> : vector<8x128xf32>
    %22 = tpu.matmul %20, %21, %cst_17 {dimension_numbers = #tpu.dot_dimension_numbers<[1], [0], [0], [1], [0, 0, 1, 1], [], []>} : vector<8x16xbf16>, vector<16x128xbf16>, vector<8x128xf32> -> vector<8x128xf32>
    %c0_18 = arith.constant 0 : index
    %c0_19 = arith.constant 0 : index
    %23 = vector.load %arg10[%c0_18, %c0_19] : memref<1x128xf32, #tpu.memory_space<vmem>>, vector<1x128xf32>
    %24 = vector.broadcast %23 : vector<1x128xf32> to vector<8x128xf32>
    %25 = arith.addf %22, %24 : vector<8x128xf32>
    %cst_20 = arith.constant 0.000000e+00 : f32
    %26 = vector.broadcast %cst_20 : f32 to vector<8x128xf32>
    %27 = arith.maximumf %19, %26 : vector<8x128xf32>
    %cst_21 = arith.constant 0.000000e+00 : f32
    %28 = vector.broadcast %cst_21 : f32 to vector<8x128xf32>
    %29 = arith.maximumf %25, %28 : vector<8x128xf32>
    %30 = arith.truncf %27 : vector<8x128xf32> to vector<8x128xbf16>
    %c0_22 = arith.constant 0 : index
    %c0_23 = arith.constant 0 : index
    %31 = vector.load %arg11[%c0_22, %c0_23] : memref<128x128xbf16, #tpu.memory_space<vmem>>, vector<128x128xbf16>
    %cst_24 = arith.constant dense<0.000000e+00> : vector<8x128xf32>
    %32 = tpu.matmul %30, %31, %cst_24 {dimension_numbers = #tpu.dot_dimension_numbers<[1], [0], [0], [1], [0, 0, 1, 1], [], []>} : vector<8x128xbf16>, vector<128x128xbf16>, vector<8x128xf32> -> vector<8x128xf32>
    %33 = arith.truncf %29 : vector<8x128xf32> to vector<8x128xbf16>
    %c0_25 = arith.constant 0 : index
    %c0_26 = arith.constant 0 : index
    %34 = vector.load %arg12[%c0_25, %c0_26] : memref<128x128xbf16, #tpu.memory_space<vmem>>, vector<128x128xbf16>
    %cst_27 = arith.constant dense<0.000000e+00> : vector<8x128xf32>
    %35 = tpu.matmul %33, %34, %cst_27 {dimension_numbers = #tpu.dot_dimension_numbers<[1], [0], [0], [1], [0, 0, 1, 1], [], []>} : vector<8x128xbf16>, vector<128x128xbf16>, vector<8x128xf32> -> vector<8x128xf32>
    %36 = arith.addf %32, %35 : vector<8x128xf32>
    %c0_28 = arith.constant 0 : index
    %c0_29 = arith.constant 0 : index
    %37 = vector.load %arg13[%c0_28, %c0_29] : memref<1x128xf32, #tpu.memory_space<vmem>>, vector<1x128xf32>
    %38 = vector.broadcast %37 : vector<1x128xf32> to vector<8x128xf32>
    %39 = arith.addf %36, %38 : vector<8x128xf32>
    %cst_30 = arith.constant 0.000000e+00 : f32
    %40 = vector.broadcast %cst_30 : f32 to vector<8x128xf32>
    %41 = arith.maximumf %39, %40 : vector<8x128xf32>
    %42 = arith.truncf %41 : vector<8x128xf32> to vector<8x128xbf16>
    %c0_31 = arith.constant 0 : index
    %c0_32 = arith.constant 0 : index
    %43 = vector.load %arg14[%c0_31, %c0_32] : memref<128x128xbf16, #tpu.memory_space<vmem>>, vector<128x128xbf16>
    %cst_33 = arith.constant dense<0.000000e+00> : vector<8x128xf32>
    %44 = tpu.matmul %42, %43, %cst_33 {dimension_numbers = #tpu.dot_dimension_numbers<[1], [0], [0], [1], [0, 0, 1, 1], [], []>} : vector<8x128xbf16>, vector<128x128xbf16>, vector<8x128xf32> -> vector<8x128xf32>
    %c0_34 = arith.constant 0 : index
    %c0_35 = arith.constant 0 : index
    %45 = vector.load %arg15[%c0_34, %c0_35] : memref<1x128xf32, #tpu.memory_space<vmem>>, vector<1x128xf32>
    %46 = vector.broadcast %45 : vector<1x128xf32> to vector<8x128xf32>
    %47 = arith.addf %44, %46 : vector<8x128xf32>
    %cst_36 = arith.constant dense<0xFF800000> : vector<8xf32>
    %48 = vector.multi_reduction <maximumf>, %47, %cst_36 [1] : vector<8x128xf32> to vector<8xf32>
    %49 = vector.shape_cast %48 : vector<8xf32> to vector<8x1xf32>
    %50 = vector.broadcast %49 : vector<8x1xf32> to vector<8x128xf32>
    %51 = arith.subf %47, %50 : vector<8x128xf32>
    %52 = math.exp %51 : vector<8x128xf32>
    %cst_37 = arith.constant dense<0.000000e+00> : vector<8xf32>
    %53 = vector.multi_reduction <add>, %52, %cst_37 [1] : vector<8x128xf32> to vector<8xf32>
    %54 = vector.shape_cast %53 : vector<8xf32> to vector<8x1xf32>
    %55 = math.log %54 : vector<8x1xf32>
    %56 = vector.broadcast %55 : vector<8x1xf32> to vector<8x128xf32>
    %57 = arith.subf %51, %56 : vector<8x128xf32>
    %c0_38 = arith.constant 0 : index
    %c0_39 = arith.constant 0 : index
    %58 = vector.load %arg16[%c0_38, %c0_39] : memref<8x128xf32, #tpu.memory_space<vmem>>, vector<8x128xf32>
    tpu.vector_store %arg16[%c0_38, %c0_39], %57 {strides = array<i32>} : memref<8x128xf32, #tpu.memory_space<vmem>>, vector<8x128xf32>,
    return
  }
  func.func @transform_0(%arg0: i32) -> (i32, i32) {
    %c0_i32 = arith.constant 0 : i32
    %c0_i32_0 = arith.constant 0 : i32
    return %arg0, %c0_i32 : i32, i32
  }
  func.func @transform_1(%arg0: i32) -> (i32, i32) {
    %c0_i32 = arith.constant 0 : i32
    %c0_i32_0 = arith.constant 0 : i32
    return %arg0, %c0_i32 : i32, i32
  }
  func.func @transform_2(%arg0: i32) -> (i32, i32) {
    %c0_i32 = arith.constant 0 : i32
    %c0_i32_0 = arith.constant 0 : i32
    %c0_i32_1 = arith.constant 0 : i32
    return %c0_i32, %c0_i32_0 : i32, i32
  }
  func.func @transform_3(%arg0: i32) -> (i32, i32) {
    %c0_i32 = arith.constant 0 : i32
    %c0_i32_0 = arith.constant 0 : i32
    %c0_i32_1 = arith.constant 0 : i32
    return %c0_i32, %c0_i32_0 : i32, i32
  }
  func.func @transform_4(%arg0: i32) -> (i32, i32) {
    %c0_i32 = arith.constant 0 : i32
    %c0_i32_0 = arith.constant 0 : i32
    %c0_i32_1 = arith.constant 0 : i32
    return %c0_i32, %c0_i32_0 : i32, i32
  }
  func.func @transform_5(%arg0: i32) -> (i32, i32) {
    %c0_i32 = arith.constant 0 : i32
    %c0_i32_0 = arith.constant 0 : i32
    %c0_i32_1 = arith.constant 0 : i32
    return %c0_i32, %c0_i32_0 : i32, i32
  }
  func.func @transform_6(%arg0: i32) -> (i32, i32) {
    %c0_i32 = arith.constant 0 : i32
    %c0_i32_0 = arith.constant 0 : i32
    %c0_i32_1 = arith.constant 0 : i32
    return %c0_i32, %c0_i32_0 : i32, i32
  }
  func.func @transform_7(%arg0: i32) -> (i32, i32) {
    %c0_i32 = arith.constant 0 : i32
    %c0_i32_0 = arith.constant 0 : i32
    %c0_i32_1 = arith.constant 0 : i32
    return %c0_i32, %c0_i32_0 : i32, i32
  }
  func.func @transform_8(%arg0: i32) -> (i32, i32) {
    %c0_i32 = arith.constant 0 : i32
    %c0_i32_0 = arith.constant 0 : i32
    %c0_i32_1 = arith.constant 0 : i32
    return %c0_i32, %c0_i32_0 : i32, i32
  }
  func.func @transform_9(%arg0: i32) -> (i32, i32) {
    %c0_i32 = arith.constant 0 : i32
    %c0_i32_0 = arith.constant 0 : i32
    %c0_i32_1 = arith.constant 0 : i32
    return %c0_i32, %c0_i32_0 : i32, i32
  }
  func.func @transform_10(%arg0: i32) -> (i32, i32) {
    %c0_i32 = arith.constant 0 : i32
    %c0_i32_0 = arith.constant 0 : i32
    %c0_i32_1 = arith.constant 0 : i32
    return %c0_i32, %c0_i32_0 : i32, i32
  }
  func.func @transform_11(%arg0: i32) -> (i32, i32) {
    %c0_i32 = arith.constant 0 : i32
    %c0_i32_0 = arith.constant 0 : i32
    %c0_i32_1 = arith.constant 0 : i32
    return %c0_i32, %c0_i32_0 : i32, i32
  }
  func.func @transform_12(%arg0: i32) -> (i32, i32) {
    %c0_i32 = arith.constant 0 : i32
    %c0_i32_0 = arith.constant 0 : i32
    %c0_i32_1 = arith.constant 0 : i32
    return %c0_i32, %c0_i32_0 : i32, i32
  }
  func.func @transform_13(%arg0: i32) -> (i32, i32) {
    %c0_i32 = arith.constant 0 : i32
    %c0_i32_0 = arith.constant 0 : i32
    %c0_i32_1 = arith.constant 0 : i32
    return %c0_i32, %c0_i32_0 : i32, i32
  }
  func.func @transform_14(%arg0: i32) -> (i32, i32) {
    %c0_i32 = arith.constant 0 : i32
    %c0_i32_0 = arith.constant 0 : i32
    %c0_i32_1 = arith.constant 0 : i32
    return %c0_i32, %c0_i32_0 : i32, i32
  }
  func.func @transform_15(%arg0: i32) -> (i32, i32) {
    %c0_i32 = arith.constant 0 : i32
    %c0_i32_0 = arith.constant 0 : i32
    return %arg0, %c0_i32 : i32, i32
  }
}

</mosaic_0001>

<llo_original>
// kernel: ffn01_forward.1
$region0: #{ffn01_forward.1}
  #allocation0 [shape = 'u32[]', space=smem, size = 0x4, offset = 0x4, fixed_abs, tag = 'smem constant byte address 0x4 - core index']
  #allocation1 [shape = 'u32[72,128]{1,0:T(1,128)}', space=vmem, size = 0x9000, scoped, tag = 'internal scratch']
  %s0 = inlined_call_operand.vmem [shape: f32[8,16], index: 0, kind: input, shape index: {}]
  %s1 = inlined_call_operand.vmem [shape: f32[8,16], index: 1, kind: input, shape index: {}]
  %s2 = inlined_call_operand.vmem [shape: f32[1,16], index: 2, kind: input, shape index: {}]
  %s3 = inlined_call_operand.vmem [shape: f32[1,16], index: 3, kind: input, shape index: {}]
  %s4 = inlined_call_operand.vmem [shape: f32[1,16], index: 4, kind: input, shape index: {}]
  %s5 = inlined_call_operand.vmem [shape: f32[1,16], index: 5, kind: input, shape index: {}]
  %s6 = inlined_call_operand.vmem [shape: bf16[16,128], index: 6, kind: input, shape index: {}]
  %s7 = inlined_call_operand.vmem [shape: f32[1,128], index: 7, kind: input, shape index: {}]
  %s8 = inlined_call_operand.vmem [shape: bf16[16,128], index: 8, kind: input, shape index: {}]
  %s9 = inlined_call_operand.vmem [shape: f32[1,128], index: 9, kind: input, shape index: {}]
  %s10 = inlined_call_operand.hbm [shape: bf16[128,128], index: 10, kind: input, shape index: {}]
  %s11 = inlined_call_operand.hbm [shape: bf16[128,128], index: 11, kind: input, shape index: {}]
  %s12 = inlined_call_operand.vmem [shape: f32[1,128], index: 12, kind: input, shape index: {}]
  %s13 = inlined_call_operand.hbm [shape: bf16[128,128], index: 13, kind: input, shape index: {}]
  %s14 = inlined_call_operand.vmem [shape: f32[1,128], index: 14, kind: input, shape index: {}]
  %s15 = inlined_call_operand.vmem [shape: f32[8,128], index: 15, kind: output, shape index: {}]
  %s16 = sld [smem:[#allocation0]]
  $region82: #{ffn01_forward.1} parent=0
    _
  %s18 = ssub.s32 1, %s16
  %s19 = scalar_select 0, %s18, %s16
  $region1: #{ffn01_forward.1} parent=0
    #allocation2 [shape = 'u8[32768]{0}', space=vmem, size = 0x8000, scoped, tag = 'input window, operand 10, single buffered']
    #allocation3 [shape = 's32[1]{0}', space=sflag, size = 0x4, scoped, tag = 'scoped memory for ffn01_forward.1']
    #allocation4 [shape = 'u8[32768]{0}', space=vmem, size = 0x8000, scoped, tag = 'input window, operand 11, single buffered']
    #allocation5 [shape = 's32[1]{0}', space=sflag, size = 0x4, scoped, tag = 'scoped memory for ffn01_forward.1']
    #allocation6 [shape = 'u8[32768]{0}', space=vmem, size = 0x8000, scoped, tag = 'input window, operand 13, single buffered']
    %20 = vsyncpa [#allocation3], 0
    %21 = vsyncpa [#allocation5], 0
    // Predicated region
    $region2: #{ffn01_forward.1} parent=1 // pred_check
      _
    $region3: #{ffn01_forward.1} parent=1 // pred_check_branch
      %23 = sbr.rel (0) target = $region5
    $region4: #{ffn01_forward.1} parent=1 // pred_region
      _
    $region5: #{ffn01_forward.1} parent=1 // pred_fallthru
      _
    // Predicated region
    $region6: #{ffn01_forward.1} parent=1 // pred_check
      _
    $region7: #{ffn01_forward.1} parent=1 // pred_check_branch
      %25 = sbr.rel (0) target = $region9
    $region8: #{ffn01_forward.1} parent=1 // pred_region
      _
    $region9: #{ffn01_forward.1} parent=1 // pred_fallthru
      _
    // Predicated region
    $region10: #{ffn01_forward.1} parent=1 // pred_check
      _
    $region11: #{ffn01_forward.1} parent=1 // pred_check_branch
      %27 = sbr.rel (0) target = $region13
    $region12: #{ffn01_forward.1} parent=1 // pred_region
      _
    $region13: #{ffn01_forward.1} parent=1 // pred_fallthru
      _
    // Predicated region
    $region14: #{ffn01_forward.1} parent=1 // pred_check
      _
    $region15: #{ffn01_forward.1} parent=1 // pred_check_branch
      %29 = sbr.rel (0) target = $region17
    $region16: #{ffn01_forward.1} parent=1 // pred_region
      _
    $region17: #{ffn01_forward.1} parent=1 // pred_fallthru
      _
    // Predicated region
    $region18: #{ffn01_forward.1} parent=1 // pred_check
      _
    $region19: #{ffn01_forward.1} parent=1 // pred_check_branch
      %31 = sbr.rel (0) target = $region21
    $region20: #{ffn01_forward.1} parent=1 // pred_region
      _
    $region21: #{ffn01_forward.1} parent=1 // pred_fallthru
      _
    // Predicated region
    $region22: #{ffn01_forward.1} parent=1 // pred_check
      _
    $region23: #{ffn01_forward.1} parent=1 // pred_check_branch
      %33 = sbr.rel (0) target = $region25
    $region24: #{ffn01_forward.1} parent=1 // pred_region
      _
    $region25: #{ffn01_forward.1} parent=1 // pred_fallthru
      _
    // Predicated region
    $region26: #{ffn01_forward.1} parent=1 // pred_check
      _
    $region27: #{ffn01_forward.1} parent=1 // pred_check_branch
      %35 = sbr.rel (0) target = $region29
    $region28: #{ffn01_forward.1} parent=1 // pred_region
      _
    $region29: #{ffn01_forward.1} parent=1 // pred_fallthru
      _
    // Predicated region
    $region30: #{ffn01_forward.1} parent=1 // pred_check
      _
    $region31: #{ffn01_forward.1} parent=1 // pred_check_branch
      %37 = sbr.rel (0) target = $region33
    $region32: #{ffn01_forward.1} parent=1 // pred_region
      _
    $region33: #{ffn01_forward.1} parent=1 // pred_fallthru
      _
    // Predicated region
    $region34: #{ffn01_forward.1} parent=1 // pred_check
      _
    $region35: #{ffn01_forward.1} parent=1 // pred_check_branch
      %39 = sbr.rel (0) target = $region37
    $region36: #{ffn01_forward.1} parent=1 // pred_region
      _
    $region37: #{ffn01_forward.1} parent=1 // pred_fallthru
      _
    // Predicated region
    $region38: #{ffn01_forward.1} parent=1 // pred_check
      _
    $region39: #{ffn01_forward.1} parent=1 // pred_check_branch
      %41 = sbr.rel (0) target = $region41
    $region40: #{ffn01_forward.1} parent=1 // pred_region
      _
    $region41: #{ffn01_forward.1} parent=1 // pred_fallthru
      _
    // Predicated region
    $region42: #{ffn01_forward.1} parent=1 // pred_check
      _
    $region43: #{ffn01_forward.1} parent=1 // pred_check_branch
      %43 = sbr.rel (0) target = $region45
    $region44: #{ffn01_forward.1} parent=1 // pred_region
      %45 = vsyncadd [#allocation3], 0
      %s46 = sshll.u32 %s10, 4
      %s47 = int_to_ptr.hbm [resolvable:$true] %s46
      %s48 = sshll.u32 [#allocation2], 4
      %s49 = int_to_ptr.vmem [resolvable:$true] %s48
      %54 = dma.hbm_to_vmem [thread:$0]  %s47, 1024, %s49, [#allocation3], 64, 64, 4
    $region45: #{ffn01_forward.1} parent=1 // pred_fallthru
      _
    // Predicated region
    $region46: #{ffn01_forward.1} parent=1 // pred_check
      _
    $region47: #{ffn01_forward.1} parent=1 // pred_check_branch
      %56 = sbr.rel (0) target = $region49
    $region48: #{ffn01_forward.1} parent=1 // pred_region
      %58 = vsyncadd [#allocation5], 0
      %s59 = sshll.u32 %s11, 4
      %s60 = int_to_ptr.hbm [resolvable:$true] %s59
      %s61 = sshll.u32 [#allocation4], 4
      %s62 = int_to_ptr.vmem [resolvable:$true] %s61
      %67 = dma.hbm_to_vmem [thread:$0]  %s60, 1024, %s62, [#allocation5], 64, 64, 4
    $region49: #{ffn01_forward.1} parent=1 // pred_fallthru
      _
    // Predicated region
    $region50: #{ffn01_forward.1} parent=1 // pred_check
      _
    $region51: #{ffn01_forward.1} parent=1 // pred_check_branch
      %69 = sbr.rel (0) target = $region53
    $region52: #{ffn01_forward.1} parent=1 // pred_region
      _
    $region53: #{ffn01_forward.1} parent=1 // pred_fallthru
      _
    // Predicated region
    $region54: #{ffn01_forward.1} parent=1 // pred_check
      _
    $region55: #{ffn01_forward.1} parent=1 // pred_check_branch
      %71 = sbr.rel (0) target = $region57
    $region56: #{ffn01_forward.1} parent=1 // pred_region
      %73 = vsyncadd [#allocation5], 0
      %s74 = sshll.u32 %s13, 4
      %s75 = int_to_ptr.hbm [resolvable:$true] %s74
      %s76 = sshll.u32 [#allocation6], 4
      %s77 = int_to_ptr.vmem [resolvable:$true] %s76
      %82 = dma.hbm_to_vmem [thread:$0]  %s75, 1024, %s77, [#allocation5], 64, 64, 4
    $region57: #{ffn01_forward.1} parent=1 // pred_fallthru
      _
    // Predicated region
    $region58: #{ffn01_forward.1} parent=1 // pred_check
      _
    $region59: #{ffn01_forward.1} parent=1 // pred_check_branch
      %84 = sbr.rel (0) target = $region61
    $region60: #{ffn01_forward.1} parent=1 // pred_region
      _
    $region61: #{ffn01_forward.1} parent=1 // pred_fallthru
      _
    // Predicated region
    $region62: #{ffn01_forward.1} parent=1 // pred_check
      _
    $region63: #{ffn01_forward.1} parent=1 // pred_check_branch
      %86 = sbr.rel (0) target = $region65
    $region64: #{ffn01_forward.1} parent=1 // pred_region
      %88 = dma.done [#allocation3], 1024
    $region65: #{ffn01_forward.1} parent=1 // pred_fallthru
      _
    // Predicated region
    $region66: #{ffn01_forward.1} parent=1 // pred_check
      _
    $region67: #{ffn01_forward.1} parent=1 // pred_check_branch
      %90 = sbr.rel (0) target = $region69
    $region68: #{ffn01_forward.1} parent=1 // pred_region
      %92 = dma.done [#allocation5], 1024
    $region69: #{ffn01_forward.1} parent=1 // pred_fallthru
      _
    // Predicated region
    $region70: #{ffn01_forward.1} parent=1 // pred_check
      _
    $region71: #{ffn01_forward.1} parent=1 // pred_check_branch
      %94 = sbr.rel (0) target = $region73
    $region72: #{ffn01_forward.1} parent=1 // pred_region
      %96 = dma.done [#allocation5], 1024
    $region73: #{ffn01_forward.1} parent=1 // pred_fallthru
      _
    %v98 = vld [vmem:[%s0] sm:$0xff]
    %v99 = vld [vmem:[%s2] sm:$0x1]
    %v101 = vperm.slane %v99, 0
    %v103 = vsub.f32 %v98, %v101
    %v104 = vld [vmem:[%s3] sm:$0x1]
    %v106 = vperm.slane %v104, 0
    %v108 = vmul.f32 %v103, %v106
    %v109 = vld [vmem:[%s1] sm:$0xff]
    %v110 = vld [vmem:[%s4] sm:$0x1]
    %v112 = vperm.slane %v110, 0
    %v114 = vsub.f32 %v109, %v112
    %v115 = vld [vmem:[%s5] sm:$0x1]
    %v117 = vperm.slane %v115, 0
    %v119 = vmul.f32 %v114, %v117
    %v120 = vpack.c.bf16 %v108, %v108
    %v121 = vld [vmem:[%s6] sm:$0xf]
    %v122 = vld [vmem:[%s6 + $0x4] sm:$0xf]
    %v123 = vld [vmem:[%s7] sm:$0x1]
    %v125 = vperm.slane %v123, 0
    %v129 = vunpack.c.l.b16 %v121
    %v130 = vunpack.c.l.b16 %v122
    %v131 = vpack.c.b16 %v130, %v129
    %vm133 = vcmask 130048
    %v135 = vsel %vm133, %v120, 0
    %137 = vmatpush.bf16.msra.mxu0 0
    %138 = vmatpush.bf16.msra.mxu0 0
    %139 = vmatpush.bf16.msra.mxu0 0
    %140 = vmatpush.bf16.msra.mxu0 0
    %141 = vmatpush.bf16.msra.mxu0 0
    %142 = vmatpush.bf16.msra.mxu0 0
    %143 = vmatpush.bf16.msra.mxu0 0
    %144 = vmatpush.bf16.msra.mxu0 %v131
    %145 = vmatmul.bf16.gmra.mxu0 %v135
    %v146 = vpop.f32.mrf.mxu0
    %v147 = vadd.f32 %v125, %v146
    %v148 = vpop.f32.mrf.mxu0
    %149 = vdwg.mxu0
    %v150 = vpack.c.bf16 %v119, %v119
    %v151 = vld [vmem:[%s8] sm:$0xf]
    %v152 = vld [vmem:[%s8 + $0x4] sm:$0xf]
    %v153 = vld [vmem:[%s9] sm:$0x1]
    %v155 = vperm.slane %v153, 0
    %v159 = vunpack.c.l.b16 %v151
    %v160 = vunpack.c.l.b16 %v152
    %v161 = vpack.c.b16 %v160, %v159
    %v164 = vsel %vm133, %v150, 0
    %166 = vmatpush.bf16.msra.mxu0 0
    %167 = vmatpush.bf16.msra.mxu0 0
    %168 = vmatpush.bf16.msra.mxu0 0
    %169 = vmatpush.bf16.msra.mxu0 0
    %170 = vmatpush.bf16.msra.mxu0 0
    %171 = vmatpush.bf16.msra.mxu0 0
    %172 = vmatpush.bf16.msra.mxu0 0
    %173 = vmatpush.bf16.msra.mxu0 %v161
    %174 = vmatmul.bf16.gmra.mxu0 %v164
    %v175 = vpop.f32.mrf.mxu0
    %v176 = vadd.f32 %v155, %v175
    %v177 = vpop.f32.mrf.mxu0
    %178 = vdwg.mxu0
    %v179 = vmax.f32 %v147, 0.0
    %v180 = vmax.f32 %v176, 0.0
    %v181 = vpack.c.bf16 %v179, %v179
    %v182 = vld [vmem:[#allocation2] sm:$0xf]
    %v183 = vld [vmem:[#allocation2 + $0x4] sm:$0xf]
    %v184 = vld [vmem:[#allocation2 + $0x8] sm:$0xf]
    %v185 = vld [vmem:[#allocation2 + $0xc] sm:$0xf]
    %v186 = vld [vmem:[#allocation2 + $0x10] sm:$0xf]
    %v187 = vld [vmem:[#allocation2 + $0x14] sm:$0xf]
    %v188 = vld [vmem:[#allocation2 + $0x18] sm:$0xf]
    %v189 = vld [vmem:[#allocation2 + $0x1c] sm:$0xf]
    %v190 = vld [vmem:[#allocation2 + $0x20] sm:$0xf]
    %v191 = vld [vmem:[#allocation2 + $0x24] sm:$0xf]
    %v192 = vld [vmem:[#allocation2 + $0x28] sm:$0xf]
    %v193 = vld [vmem:[#allocation2 + $0x2c] sm:$0xf]
    %v194 = vld [vmem:[#allocation2 + $0x30] sm:$0xf]
    %v195 = vld [vmem:[#allocation2 + $0x34] sm:$0xf]
    %v196 = vld [vmem:[#allocation2 + $0x38] sm:$0xf]
    %v197 = vld [vmem:[#allocation2 + $0x3c] sm:$0xf]
    %v198 = vpack.c.bf16 %v180, %v180
    %v199 = vld [vmem:[#allocation4] sm:$0xf]
    %v200 = vld [vmem:[#allocation4 + $0x4] sm:$0xf]
    %v201 = vld [vmem:[#allocation4 + $0x8] sm:$0xf]
    %v202 = vld [vmem:[#allocation4 + $0xc] sm:$0xf]
    %v203 = vld [vmem:[#allocation4 + $0x10] sm:$0xf]
    %v204 = vld [vmem:[#allocation4 + $0x14] sm:$0xf]
    %v205 = vld [vmem:[#allocation4 + $0x18] sm:$0xf]
    %v206 = vld [vmem:[#allocation4 + $0x1c] sm:$0xf]
    %v207 = vld [vmem:[#allocation4 + $0x20] sm:$0xf]
    %v208 = vld [vmem:[#allocation4 + $0x24] sm:$0xf]
    %v209 = vld [vmem:[#allocation4 + $0x28] sm:$0xf]
    %v210 = vld [vmem:[#allocation4 + $0x2c] sm:$0xf]
    %v211 = vld [vmem:[#allocation4 + $0x30] sm:$0xf]
    %v212 = vld [vmem:[#allocation4 + $0x34] sm:$0xf]
    %v213 = vld [vmem:[#allocation4 + $0x38] sm:$0xf]
    %v214 = vld [vmem:[#allocation4 + $0x3c] sm:$0xf]
    %v231 = vunpack.c.l.b16 %v199
    %v232 = vunpack.c.l.b16 %v200
    %v233 = vunpack.c.l.b16 %v201
    %v234 = vunpack.c.l.b16 %v202
    %v235 = vunpack.c.l.b16 %v203
    %v236 = vunpack.c.l.b16 %v204
    %v237 = vunpack.c.l.b16 %v205
    %v238 = vunpack.c.l.b16 %v206
    %v239 = vunpack.c.l.b16 %v207
    %v240 = vunpack.c.l.b16 %v208
    %v241 = vunpack.c.l.b16 %v209
    %v242 = vunpack.c.l.b16 %v210
    %v243 = vunpack.c.l.b16 %v211
    %v244 = vunpack.c.l.b16 %v212
    %v245 = vunpack.c.l.b16 %v213
    %v246 = vunpack.c.l.b16 %v214
    %v247 = vpack.c.b16 %v232, %v231
    %v248 = vpack.c.b16 %v234, %v233
    %v249 = vpack.c.b16 %v236, %v235
    %v250 = vpack.c.b16 %v238, %v237
    %v251 = vpack.c.b16 %v240, %v239
    %v252 = vpack.c.b16 %v242, %v241
    %v253 = vpack.c.b16 %v244, %v243
    %v254 = vpack.c.b16 %v246, %v245
    %263 = vmatpush.bf16.msra.mxu0 %v254
    %264 = vmatpush.bf16.msra.mxu0 %v253
    %265 = vmatpush.bf16.msra.mxu0 %v252
    %266 = vmatpush.bf16.msra.mxu0 %v251
    %267 = vmatpush.bf16.msra.mxu0 %v250
    %268 = vmatpush.bf16.msra.mxu0 %v249
    %269 = vmatpush.bf16.msra.mxu0 %v248
    %270 = vmatpush.bf16.msra.mxu0 %v247
    %271 = vmatmul.bf16.gmra.mxu0 %v198
    %v272 = vpop.f32.mrf.mxu0
    %v273 = vadd.f32 0.0, %v272
    %v274 = vpop.f32.mrf.mxu0
    %275 = vdwg.mxu0
    %v292 = vunpack.c.l.b16 %v182
    %v293 = vunpack.c.l.b16 %v183
    %v294 = vunpack.c.l.b16 %v184
    %v295 = vunpack.c.l.b16 %v185
    %v296 = vunpack.c.l.b16 %v186
    %v297 = vunpack.c.l.b16 %v187
    %v298 = vunpack.c.l.b16 %v188
    %v299 = vunpack.c.l.b16 %v189
    %v300 = vunpack.c.l.b16 %v190
    %v301 = vunpack.c.l.b16 %v191
    %v302 = vunpack.c.l.b16 %v192
    %v303 = vunpack.c.l.b16 %v193
    %v304 = vunpack.c.l.b16 %v194
    %v305 = vunpack.c.l.b16 %v195
    %v306 = vunpack.c.l.b16 %v196
    %v307 = vunpack.c.l.b16 %v197
    %v308 = vpack.c.b16 %v293, %v292
    %v309 = vpack.c.b16 %v295, %v294
    %v310 = vpack.c.b16 %v297, %v296
    %v311 = vpack.c.b16 %v299, %v298
    %v312 = vpack.c.b16 %v301, %v300
    %v313 = vpack.c.b16 %v303, %v302
    %v314 = vpack.c.b16 %v305, %v304
    %v315 = vpack.c.b16 %v307, %v306
    %324 = vmatpush.bf16.msra.mxu0 %v315
    %325 = vmatpush.bf16.msra.mxu0 %v314
    %326 = vmatpush.bf16.msra.mxu0 %v313
    %327 = vmatpush.bf16.msra.mxu0 %v312
    %328 = vmatpush.bf16.msra.mxu0 %v311
    %329 = vmatpush.bf16.msra.mxu0 %v310
    %330 = vmatpush.bf16.msra.mxu0 %v309
    %331 = vmatpush.bf16.msra.mxu0 %v308
    %332 = vmatmul.bf16.gmra.mxu0 %v181
    %v333 = vpop.f32.mrf.mxu0
    %v334 = vadd.f32 %v273, %v333
    %v335 = vpop.f32.mrf.mxu0
    %336 = vdwg.mxu0
    %v337 = vld [vmem:[%s12] sm:$0x1]
    %v339 = vperm.slane %v337, 0
    %v341 = vadd.f32 %v334, %v339
    %v342 = vmax.f32 %v341, 0.0
    %v343 = vpack.c.bf16 %v342, %v342
    %v344 = vld [vmem:[#allocation6] sm:$0xf]
    %v345 = vld [vmem:[#allocation6 + $0x4] sm:$0xf]
    %v346 = vld [vmem:[#allocation6 + $0x8] sm:$0xf]
    %v347 = vld [vmem:[#allocation6 + $0xc] sm:$0xf]
    %v348 = vld [vmem:[#allocation6 + $0x10] sm:$0xf]
    %v349 = vld [vmem:[#allocation6 + $0x14] sm:$0xf]
    %v350 = vld [vmem:[#allocation6 + $0x18] sm:$0xf]
    %v351 = vld [vmem:[#allocation6 + $0x1c] sm:$0xf]
    %v352 = vld [vmem:[#allocation6 + $0x20] sm:$0xf]
    %v353 = vld [vmem:[#allocation6 + $0x24] sm:$0xf]
    %v354 = vld [vmem:[#allocation6 + $0x28] sm:$0xf]
    %v355 = vld [vmem:[#allocation6 + $0x2c] sm:$0xf]
    %v356 = vld [vmem:[#allocation6 + $0x30] sm:$0xf]
    %v357 = vld [vmem:[#allocation6 + $0x34] sm:$0xf]
    %v358 = vld [vmem:[#allocation6 + $0x38] sm:$0xf]
    %v359 = vld [vmem:[#allocation6 + $0x3c] sm:$0xf]
    %v360 = vld [vmem:[%s14] sm:$0x1]
    %v362 = vperm.slane %v360, 0
    %v380 = vunpack.c.l.b16 %v344
    %v381 = vunpack.c.l.b16 %v345
    %v382 = vunpack.c.l.b16 %v346
    %v383 = vunpack.c.l.b16 %v347
    %v384 = vunpack.c.l.b16 %v348
    %v385 = vunpack.c.l.b16 %v349
    %v386 = vunpack.c.l.b16 %v350
    %v387 = vunpack.c.l.b16 %v351
    %v388 = vunpack.c.l.b16 %v352
    %v389 = vunpack.c.l.b16 %v353
    %v390 = vunpack.c.l.b16 %v354
    %v391 = vunpack.c.l.b16 %v355
    %v392 = vunpack.c.l.b16 %v356
    %v393 = vunpack.c.l.b16 %v357
    %v394 = vunpack.c.l.b16 %v358
    %v395 = vunpack.c.l.b16 %v359
    %v396 = vpack.c.b16 %v381, %v380
    %v397 = vpack.c.b16 %v383, %v382
    %v398 = vpack.c.b16 %v385, %v384
    %v399 = vpack.c.b16 %v387, %v386
    %v400 = vpack.c.b16 %v389, %v388
    %v401 = vpack.c.b16 %v391, %v390
    %v402 = vpack.c.b16 %v393, %v392
    %v403 = vpack.c.b16 %v395, %v394
    %412 = vmatpush.bf16.msra.mxu0 %v403
    %413 = vmatpush.bf16.msra.mxu0 %v402
    %414 = vmatpush.bf16.msra.mxu0 %v401
    %415 = vmatpush.bf16.msra.mxu0 %v400
    %416 = vmatpush.bf16.msra.mxu0 %v399
    %417 = vmatpush.bf16.msra.mxu0 %v398
    %418 = vmatpush.bf16.msra.mxu0 %v397
    %419 = vmatpush.bf16.msra.mxu0 %v396
    %420 = vmatmul.bf16.gmra.mxu0 %v343
    %v421 = vpop.f32.mrf.mxu0
    %v422 = vadd.f32 %v362, %v421
    %v423 = vpop.f32.mrf.mxu0
    %424 = vdwg.mxu0
    %425 = vmax.xlane.f32.xlu0 %v422
    %v426 = vpop.xlane.xlu0 %425
    %v427 = vsub.f32 %v422, %v426
    %v428 = vmul.f32 %v427, 1.442695
    %v429 = vpow.pop %v428
    %430 = vadd.xlane.f32.xlu0 %v429
    %v431 = vpop.xlane.xlu0 %430
    %v432 = vlog2.pop %v431
    %v433 = vmul.f32 %v432, 0.6931472
    %v434 = vsub.f32 %v427, %v433
    %435 = vst [vmem:[%s15] sm:$0xff] %v434
    // Predicated region
    $region74: #{ffn01_forward.1} parent=1 // pred_check
      _
    $region75: #{ffn01_forward.1} parent=1 // pred_check_branch
      %437 = sbr.rel (0) target = $region77
    $region76: #{ffn01_forward.1} parent=1 // pred_region
      _
    $region77: #{ffn01_forward.1} parent=1 // pred_fallthru
      _
    // Predicated region
    $region78: #{ffn01_forward.1} parent=1 // pred_check
      _
    $region79: #{ffn01_forward.1} parent=1 // pred_check_branch
      %439 = sbr.rel (0) target = $region81
    $region80: #{ffn01_forward.1} parent=1 // pred_region
      _
    $region81: #{ffn01_forward.1} parent=1 // pred_fallthru
      _
    %440 = vsyncpa [#allocation3], 1
    %441 = vsyncpa [#allocation5], 1

</llo_original>
